<compile_context>
chip_gen: v7x
topology: tpu7x:2x2x1
jax: 0.10.0
libtpu: 0.0.40
codegen_flags: <defaults>
</compile_context>

<pallas_src>
import jax
import jax.numpy as jnp
from jax.experimental import pallas as pl
from jax.experimental.pallas import tpu as pltpu


def _coordatt_kernel(x_ref, pool_ref, w1t_ref, b1_ref, wht_ref, bh_ref,
                     wwt_ref, bw_ref, ah_ref, aw_ref):
    H = ah_ref.shape[1]

    # One batch element, lane-dense: (C, H*W). Upcast immediately (VPU/EUP math
    # stays f32; works on v5e which has no bf16 VPU path).
    x = x_ref[0].astype(jnp.float32)

    # Coordinate pooling + concat as a single 2D MXU matmul:
    #   pooled[c, i]   = mean_w x[c, i, :]   (i < H)
    #   pooled[c, H+j] = mean_h x[c, :, j]
    pooled = jnp.dot(x, pool_ref[...], preferred_element_type=jnp.float32)  # (C, H+W)

    # Shared stem: 1x1 conv (BN folded into w1t/b1) + h_swish, as a 2D matmul
    # with the (tiny) pooled tensor transposed so channels sit on the lane axis.
    pooled_t = jnp.transpose(pooled)                                        # (H+W, C)
    y = jnp.dot(pooled_t, w1t_ref[...],
                preferred_element_type=jnp.float32) + b1_ref[...]           # (H+W, mip)
    y = y * (jnp.clip(y + 3.0, 0.0, 6.0) * (1.0 / 6.0))                     # h_swish

    y_h = y[:H, :]                                                          # (H, mip)
    y_w = y[H:, :]                                                          # (W, mip)

    a_h = jax.nn.sigmoid(
        jnp.dot(y_h, wht_ref[...], preferred_element_type=jnp.float32)
        + bh_ref[...])                                                      # (H, oup)
    a_w = jax.nn.sigmoid(
        jnp.dot(y_w, wwt_ref[...], preferred_element_type=jnp.float32)
        + bw_ref[...])                                                      # (W, oup)

    # Channel-last, un-expanded outputs (lane dim = oup -> lane-dense stores).
    ah_ref[0] = a_h
    aw_ref[0] = a_w


def _round_up(v, m):
    return -(-v // m) * m


def coord_att_pallas(x, params, eps=1e-5, input_dtype=None):
    """Returns (a_w, a_h), each (n, oup, h, w), matching CoordAtt.forward (eval BN)."""
    n, c, h, w = x.shape
    w1, b1, gamma, beta, mean, var, wh, bh, ww, bw = params
    mip = w1.shape[0]
    oup = wh.shape[0]
    hw, L = h * w, h + w

    # Fold eval-mode BatchNorm2d into conv1:
    #   scale*(W x + b) + shift == (scale*W) x + (scale*b + shift)
    inv_std = gamma / jnp.sqrt(var + eps)
    shift = beta - mean * inv_std
    w1t = (inv_std[:, None] * w1).T.astype(jnp.float32)              # (c, mip)
    b1f = (inv_std * b1 + shift).reshape(1, mip).astype(jnp.float32)
    wht = wh.T.astype(jnp.float32)                                   # (mip, oup)
    wwt = ww.T.astype(jnp.float32)
    bhf = bh.reshape(1, oup).astype(jnp.float32)
    bwf = bw.reshape(1, oup).astype(jnp.float32)

    # Pooling matrix (h*w, h+w): columns 0..h-1 average over width (1/w),
    # columns h..h+w-1 average over height (1/h).  Pooling + concat == x @ pool.
    rows = jnp.arange(hw) // w
    cols = jnp.arange(hw) % w
    p_h = (rows[:, None] == jnp.arange(h)[None, :]).astype(jnp.float32) * (1.0 / w)
    p_w = (cols[:, None] == jnp.arange(w)[None, :]).astype(jnp.float32) * (1.0 / h)
    pool = jnp.concatenate([p_h, p_w], axis=1)                       # (hw, h+w)

    # Lane-dense input: (n, c, h*w) is a free reshape of contiguous NCHW.
    x2 = x.reshape(n, c, hw)
    if input_dtype is not None:
        x2 = x2.astype(input_dtype)     # e.g. bf16: halves HBM read traffic
    x_item = jnp.dtype(x2.dtype).itemsize

    # (8,128)-padded VMEM footprint of one grid step (double-buffered blocks +
    # in-kernel intermediates), used to size vmem_limit_bytes per generation.
    f32 = 4
    blk_x = _round_up(c, 8) * _round_up(hw, 128) * x_item
    blk_out = (_round_up(h, 8) + _round_up(w, 8)) * _round_up(oup, 128) * f32
    blk_const = (_round_up(hw, 8) * _round_up(L, 128)
                 + _round_up(c, 8) * _round_up(mip, 128)
                 + 2 * _round_up(mip, 8) * _round_up(oup, 128)
                 + 8 * _round_up(mip, 128)
                 + 2 * 8 * _round_up(oup, 128)) * f32
    inter = (_round_up(c, 8) * _round_up(L, 128)
             + _round_up(L, 8) * _round_up(c, 128)
             + _round_up(L, 8) * _round_up(mip, 128)) * f32
    footprint = 2 * (blk_x + blk_out) + blk_const + inter

    try:
        info = pltpu.get_tpu_info()
        vmem_cap = int(getattr(info, "vmem_capacity_bytes", 64 * 1024 * 1024))
    except Exception:
        vmem_cap = 64 * 1024 * 1024     # conservative (v7x per-core) fallback
    vmem_limit = min(int(0.9 * vmem_cap),
                     max(32 * 1024 * 1024, footprint + (4 << 20)))
    # TODO(synk): if a single (c, h*w) plane ever exceeds ~0.4*VMEM capacity,
    # add a channel/spatial grid axis with a small accumulator instead of one
    # per-batch block.

    def _full(shape):
        return pl.BlockSpec(shape, lambda i: (0,) * len(shape))

    grid_spec = pl.GridSpec(
        grid=(n,),
        in_specs=[
            pl.BlockSpec((1, c, hw), lambda i: (i, 0, 0)),   # x, one batch element
            _full((hw, L)),      # pooling matrix
            _full((c, mip)),     # conv1 weight (BN folded), transposed
            _full((1, mip)),     # conv1 bias   (BN folded)
            _full((mip, oup)),   # conv_h weight, transposed
            _full((1, oup)),     # conv_h bias
            _full((mip, oup)),   # conv_w weight, transposed
            _full((1, oup)),     # conv_w bias
        ],
        out_specs=[
            pl.BlockSpec((1, h, oup), lambda i: (i, 0, 0)),  # a_h, channel-last
            pl.BlockSpec((1, w, oup), lambda i: (i, 0, 0)),  # a_w, channel-last
        ],
    )

    a_h, a_w = pl.pallas_call(
        _coordatt_kernel,
        out_shape=(jax.ShapeDtypeStruct((n, h, oup), jnp.float32),
                   jax.ShapeDtypeStruct((n, w, oup), jnp.float32)),
        grid_spec=grid_spec,
        compiler_params=pltpu.CompilerParams(
            dimension_semantics=("parallel",),
            vmem_limit_bytes=vmem_limit),
    )(x2, pool, w1t, b1f, wht, bhf, wwt, bwf)

    # Transpose to NCHW-style and expand(-1,-1,h,w) outside the kernel; XLA
    # fuses the broadcast into the consumer, so the kernel only wrote
    # n*oup*(h+w) floats instead of 2*n*oup*h*w.
    a_h_full = jnp.broadcast_to(
        jnp.transpose(a_h, (0, 2, 1))[:, :, :, None], (n, oup, h, w))
    a_w_full = jnp.broadcast_to(
        jnp.transpose(a_w, (0, 2, 1))[:, :, None, :], (n, oup, h, w))
    return a_w_full, a_h_full


def coord_att_ref(x, params, eps=1e-5):
    """Pure-JAX reference reproducing the PyTorch forward (eval-mode BN)."""
    w1, b1, gamma, beta, mean, var, wh, bh, ww, bw = params
    n, c, h, w = x.shape
    x_h = jnp.mean(x, axis=3, keepdims=True)                          # (n,c,h,1)
    x_w = jnp.mean(x, axis=2, keepdims=True).transpose(0, 1, 3, 2)    # (n,c,w,1)
    y = jnp.concatenate([x_h, x_w], axis=2)                           # (n,c,h+w,1)
    y = jnp.einsum('oc,nchw->nohw', w1, y) + b1[None, :, None, None]
    y = ((y - mean[None, :, None, None])
         / jnp.sqrt(var[None, :, None, None] + eps)
         * gamma[None, :, None, None] + beta[None, :, None, None])
    y = y * (jnp.clip(y + 3.0, 0.0, 6.0) / 6.0)
    y_h, y_w = y[:, :, :h], y[:, :, h:]
    y_w = y_w.transpose(0, 1, 3, 2)
    a_h = jax.nn.sigmoid(jnp.einsum('oc,nchw->nohw', wh, y_h) + bh[None, :, None, None])
    a_w = jax.nn.sigmoid(jnp.einsum('oc,nchw->nohw', ww, y_w) + bw[None, :, None, None])
    a_h = jnp.broadcast_to(a_h, (n, wh.shape[0], h, w))
    a_w = jnp.broadcast_to(a_w, (n, ww.shape[0], h, w))
    return a_w, a_h


if __name__ == "__main__":
    key = jax.random.PRNGKey(0)
    n, c, h, w = 2, 4, 16, 16
    inp = oup = c
    reduction = 32
    mip = max(8, inp // reduction)

    keys = jax.random.split(key, 11)
    x = jax.random.normal(keys[0], (n, c, h, w), jnp.float32)
    # Deterministic synthetic parameters (shapes from CoordAtt.__init__):
    w1 = 0.5 * jax.random.normal(keys[1], (mip, inp), jnp.float32)       # conv1 (mip,inp,1,1)
    b1 = 0.1 * jax.random.normal(keys[2], (mip,), jnp.float32)
    gamma = 1.0 + 0.1 * jax.random.normal(keys[3], (mip,), jnp.float32)  # bn1 weight
    beta = 0.1 * jax.random.normal(keys[4], (mip,), jnp.float32)         # bn1 bias
    mean = 0.1 * jax.random.normal(keys[5], (mip,), jnp.float32)         # bn1 running_mean
    var = jnp.abs(jax.random.normal(keys[6], (mip,), jnp.float32)) + 0.5 # bn1 running_var
    wh = 0.5 * jax.random.normal(keys[7], (oup, mip), jnp.float32)       # conv_h (oup,mip,1,1)
    bh = 0.1 * jax.random.normal(keys[8], (oup,), jnp.float32)
    ww = 0.5 * jax.random.normal(keys[9], (oup, mip), jnp.float32)       # conv_w (oup,mip,1,1)
    bw = 0.1 * jax.random.normal(keys[10], (oup,), jnp.float32)
    params = (w1, b1, gamma, beta, mean, var, wh, bh, ww, bw)

    a_w, a_h = coord_att_pallas(x, params)
    jax.block_until_ready((a_w, a_h))

    r_w, r_h = coord_att_ref(x, params)
    assert a_w.shape == (n, oup, h, w) and a_h.shape == (n, oup, h, w)
    assert jnp.allclose(a_w, r_w, atol=2e-5, rtol=2e-5)
    assert jnp.allclose(a_h, r_h, atol=2e-5, rtol=2e-5)
    print("KERNEL_OK")
</pallas_src>

<mosaic_0001>
module attributes {stable_mosaic.version = 11 : i64} {
  func.func @_coordatt_kernel(%arg0: i32, %arg1: memref<1x4x256xf32, #tpu.memory_space<vmem>>, %arg2: memref<256x32xf32, #tpu.memory_space<vmem>>, %arg3: memref<4x8xf32, #tpu.memory_space<vmem>>, %arg4: memref<1x8xf32, #tpu.memory_space<vmem>>, %arg5: memref<8x4xf32, #tpu.memory_space<vmem>>, %arg6: memref<1x4xf32, #tpu.memory_space<vmem>>, %arg7: memref<8x4xf32, #tpu.memory_space<vmem>>, %arg8: memref<1x4xf32, #tpu.memory_space<vmem>>, %arg9: memref<1x16x4xf32, #tpu.memory_space<vmem>>, %arg10: memref<1x16x4xf32, #tpu.memory_space<vmem>>) attributes {dimension_semantics = [#tpu.dimension_semantics<parallel>], iteration_bounds = array<i64: 2>, scalar_prefetch = 0 : i64, scratch_operands = 0 : i64, tpu.core_type = #tpu.core_type<tc>, window_params = [{transform_indices = @transform_0, window_bounds = array<i64: 1, 4, 256>}, {pipeline_mode = #tpu.pipeline_mode<synchronous>, transform_indices = @transform_1, window_bounds = array<i64: 256, 32>}, {pipeline_mode = #tpu.pipeline_mode<synchronous>, transform_indices = @transform_2, window_bounds = array<i64: 4, 8>}, {pipeline_mode = #tpu.pipeline_mode<synchronous>, transform_indices = @transform_3, window_bounds = array<i64: 1, 8>}, {pipeline_mode = #tpu.pipeline_mode<synchronous>, transform_indices = @transform_4, window_bounds = array<i64: 8, 4>}, {pipeline_mode = #tpu.pipeline_mode<synchronous>, transform_indices = @transform_5, window_bounds = array<i64: 1, 4>}, {pipeline_mode = #tpu.pipeline_mode<synchronous>, transform_indices = @transform_6, window_bounds = array<i64: 8, 4>}, {pipeline_mode = #tpu.pipeline_mode<synchronous>, transform_indices = @transform_7, window_bounds = array<i64: 1, 4>}, {transform_indices = @transform_8, window_bounds = array<i64: 1, 16, 4>}, {transform_indices = @transform_9, window_bounds = array<i64: 1, 16, 4>}]} {
    %c0 = arith.constant 0 : index
    %c0_0 = arith.constant 0 : index
    %c0_1 = arith.constant 0 : index
    %0 = vector.load %arg1[%c0, %c0_0, %c0_1] : memref<1x4x256xf32, #tpu.memory_space<vmem>>, vector<1x4x256xf32>
    %1 = vector.shape_cast %0 : vector<1x4x256xf32> to vector<4x256xf32>
    %c0_2 = arith.constant 0 : index
    %c0_3 = arith.constant 0 : index
    %2 = vector.load %arg2[%c0_2, %c0_3] : memref<256x32xf32, #tpu.memory_space<vmem>>, vector<256x32xf32>
    %cst = arith.constant dense<0.000000e+00> : vector<4x32xf32>
    %3 = tpu.matmul %1, %2, %cst {dimension_numbers = #tpu.dot_dimension_numbers<[1], [0], [0], [1], [0, 0, 1, 1], [], []>} : vector<4x256xf32>, vector<256x32xf32>, vector<4x32xf32> -> vector<4x32xf32>
    %4 = tpu.transpose %3, [1, 0] : vector<4x32xf32> -> vector<32x4xf32>
    %c0_4 = arith.constant 0 : index
    %c0_5 = arith.constant 0 : index
    %5 = vector.load %arg3[%c0_4, %c0_5] : memref<4x8xf32, #tpu.memory_space<vmem>>, vector<4x8xf32>
    %cst_6 = arith.constant dense<0.000000e+00> : vector<32x8xf32>
    %6 = tpu.matmul %4, %5, %cst_6 {dimension_numbers = #tpu.dot_dimension_numbers<[1], [0], [0], [1], [0, 0, 1, 1], [], []>} : vector<32x4xf32>, vector<4x8xf32>, vector<32x8xf32> -> vector<32x8xf32>
    %c0_7 = arith.constant 0 : index
    %c0_8 = arith.constant 0 : index
    %7 = vector.load %arg4[%c0_7, %c0_8] : memref<1x8xf32, #tpu.memory_space<vmem>>, vector<1x8xf32>
    %8 = vector.broadcast %7 : vector<1x8xf32> to vector<32x8xf32>
    %9 = arith.addf %6, %8 : vector<32x8xf32>
    %cst_9 = arith.constant 3.000000e+00 : f32
    %10 = vector.broadcast %cst_9 : f32 to vector<32x8xf32>
    %11 = arith.addf %9, %10 : vector<32x8xf32>
    %cst_10 = arith.constant 0.000000e+00 : f32
    %cst_11 = arith.constant 6.000000e+00 : f32
    %12 = vector.broadcast %cst_10 : f32 to vector<32x8xf32>
    %13 = arith.maximumf %12, %11 : vector<32x8xf32>
    %14 = vector.broadcast %cst_11 : f32 to vector<32x8xf32>
    %15 = arith.minimumf %14, %13 : vector<32x8xf32>
    %cst_12 = arith.constant 0.166666672 : f32
    %16 = vector.broadcast %cst_12 : f32 to vector<32x8xf32>
    %17 = arith.mulf %15, %16 : vector<32x8xf32>
    %18 = arith.mulf %9, %17 : vector<32x8xf32>
    %19 = vector.extract_strided_slice %18 {offsets = [0, 0], sizes = [16, 8], strides = [1, 1]} : vector<32x8xf32> to vector<16x8xf32>
    %20 = vector.extract_strided_slice %18 {offsets = [16, 0], sizes = [16, 8], strides = [1, 1]} : vector<32x8xf32> to vector<16x8xf32>
    %c0_13 = arith.constant 0 : index
    %c0_14 = arith.constant 0 : index
    %21 = vector.load %arg5[%c0_13, %c0_14] : memref<8x4xf32, #tpu.memory_space<vmem>>, vector<8x4xf32>
    %cst_15 = arith.constant dense<0.000000e+00> : vector<16x4xf32>
    %22 = tpu.matmul %19, %21, %cst_15 {dimension_numbers = #tpu.dot_dimension_numbers<[1], [0], [0], [1], [0, 0, 1, 1], [], []>} : vector<16x8xf32>, vector<8x4xf32>, vector<16x4xf32> -> vector<16x4xf32>
    %c0_16 = arith.constant 0 : index
    %c0_17 = arith.constant 0 : index
    %23 = vector.load %arg6[%c0_16, %c0_17] : memref<1x4xf32, #tpu.memory_space<vmem>>, vector<1x4xf32>
    %24 = vector.broadcast %23 : vector<1x4xf32> to vector<16x4xf32>
    %25 = arith.addf %22, %24 : vector<16x4xf32>
    %26 = arith.negf %25 : vector<16x4xf32>
    %27 = math.exp %26 : vector<16x4xf32>
    %cst_18 = arith.constant 1.000000e+00 : f32
    %28 = vector.broadcast %cst_18 : f32 to vector<16x4xf32>
    %29 = arith.addf %28, %27 : vector<16x4xf32>
    %30 = arith.divf %28, %29 : vector<16x4xf32>
    %c0_19 = arith.constant 0 : index
    %c0_20 = arith.constant 0 : index
    %31 = vector.load %arg7[%c0_19, %c0_20] : memref<8x4xf32, #tpu.memory_space<vmem>>, vector<8x4xf32>
    %cst_21 = arith.constant dense<0.000000e+00> : vector<16x4xf32>
    %32 = tpu.matmul %20, %31, %cst_21 {dimension_numbers = #tpu.dot_dimension_numbers<[1], [0], [0], [1], [0, 0, 1, 1], [], []>} : vector<16x8xf32>, vector<8x4xf32>, vector<16x4xf32> -> vector<16x4xf32>
    %c0_22 = arith.constant 0 : index
    %c0_23 = arith.constant 0 : index
    %33 = vector.load %arg8[%c0_22, %c0_23] : memref<1x4xf32, #tpu.memory_space<vmem>>, vector<1x4xf32>
    %34 = vector.broadcast %33 : vector<1x4xf32> to vector<16x4xf32>
    %35 = arith.addf %32, %34 : vector<16x4xf32>
    %36 = arith.negf %35 : vector<16x4xf32>
    %37 = math.exp %36 : vector<16x4xf32>
    %cst_24 = arith.constant 1.000000e+00 : f32
    %38 = vector.broadcast %cst_24 : f32 to vector<16x4xf32>
    %39 = arith.addf %38, %37 : vector<16x4xf32>
    %40 = arith.divf %38, %39 : vector<16x4xf32>
    %c0_25 = arith.constant 0 : index
    %c0_26 = arith.constant 0 : index
    %c0_27 = arith.constant 0 : index
    %41 = vector.load %arg9[%c0_25, %c0_26, %c0_27] : memref<1x16x4xf32, #tpu.memory_space<vmem>>, vector<1x16x4xf32>
    %42 = vector.shape_cast %41 : vector<1x16x4xf32> to vector<16x4xf32>
    %43 = vector.shape_cast %30 : vector<16x4xf32> to vector<1x16x4xf32>
    tpu.vector_store %arg9[%c0_25, %c0_26, %c0_27], %43 {strides = array<i32>} : memref<1x16x4xf32, #tpu.memory_space<vmem>>, vector<1x16x4xf32>,
    %c0_28 = arith.constant 0 : index
    %c0_29 = arith.constant 0 : index
    %c0_30 = arith.constant 0 : index
    %44 = vector.load %arg10[%c0_28, %c0_29, %c0_30] : memref<1x16x4xf32, #tpu.memory_space<vmem>>, vector<1x16x4xf32>
    %45 = vector.shape_cast %44 : vector<1x16x4xf32> to vector<16x4xf32>
    %46 = vector.shape_cast %40 : vector<16x4xf32> to vector<1x16x4xf32>
    tpu.vector_store %arg10[%c0_28, %c0_29, %c0_30], %46 {strides = array<i32>} : memref<1x16x4xf32, #tpu.memory_space<vmem>>, vector<1x16x4xf32>,
    return
  }
  func.func @transform_0(%arg0: i32) -> (i32, i32, i32) {
    %c0_i32 = arith.constant 0 : i32
    %c0_i32_0 = arith.constant 0 : i32
    %c0_i32_1 = arith.constant 0 : i32
    return %arg0, %c0_i32, %c0_i32_0 : i32, i32, i32
  }
  func.func @transform_1(%arg0: i32) -> (i32, i32) {
    %c0_i32 = arith.constant 0 : i32
    %c0_i32_0 = arith.constant 0 : i32
    %c0_i32_1 = arith.constant 0 : i32
    return %c0_i32, %c0_i32_0 : i32, i32
  }
  func.func @transform_2(%arg0: i32) -> (i32, i32) {
    %c0_i32 = arith.constant 0 : i32
    %c0_i32_0 = arith.constant 0 : i32
    %c0_i32_1 = arith.constant 0 : i32
    return %c0_i32, %c0_i32_0 : i32, i32
  }
  func.func @transform_3(%arg0: i32) -> (i32, i32) {
    %c0_i32 = arith.constant 0 : i32
    %c0_i32_0 = arith.constant 0 : i32
    %c0_i32_1 = arith.constant 0 : i32
    return %c0_i32, %c0_i32_0 : i32, i32
  }
  func.func @transform_4(%arg0: i32) -> (i32, i32) {
    %c0_i32 = arith.constant 0 : i32
    %c0_i32_0 = arith.constant 0 : i32
    %c0_i32_1 = arith.constant 0 : i32
    return %c0_i32, %c0_i32_0 : i32, i32
  }
  func.func @transform_5(%arg0: i32) -> (i32, i32) {
    %c0_i32 = arith.constant 0 : i32
    %c0_i32_0 = arith.constant 0 : i32
    %c0_i32_1 = arith.constant 0 : i32
    return %c0_i32, %c0_i32_0 : i32, i32
  }
  func.func @transform_6(%arg0: i32) -> (i32, i32) {
    %c0_i32 = arith.constant 0 : i32
    %c0_i32_0 = arith.constant 0 : i32
    %c0_i32_1 = arith.constant 0 : i32
    return %c0_i32, %c0_i32_0 : i32, i32
  }
  func.func @transform_7(%arg0: i32) -> (i32, i32) {
    %c0_i32 = arith.constant 0 : i32
    %c0_i32_0 = arith.constant 0 : i32
    %c0_i32_1 = arith.constant 0 : i32
    return %c0_i32, %c0_i32_0 : i32, i32
  }
  func.func @transform_8(%arg0: i32) -> (i32, i32, i32) {
    %c0_i32 = arith.constant 0 : i32
    %c0_i32_0 = arith.constant 0 : i32
    %c0_i32_1 = arith.constant 0 : i32
    return %arg0, %c0_i32, %c0_i32_0 : i32, i32, i32
  }
  func.func @transform_9(%arg0: i32) -> (i32, i32, i32) {
    %c0_i32 = arith.constant 0 : i32
    %c0_i32_0 = arith.constant 0 : i32
    %c0_i32_1 = arith.constant 0 : i32
    return %arg0, %c0_i32, %c0_i32_0 : i32, i32, i32
  }
}

</mosaic_0001>

<llo_original>
// kernel: tpu_custom_call.1
$region0: #{tpu_custom_call.1}
  #allocation0 [shape = 'u32[]', space=smem, size = 0x4, offset = 0x4, fixed_abs, tag = 'smem constant byte address 0x4 - core index']
  #allocation1 [shape = 'u32[144,128]{1,0:T(1,128)}', space=vmem, size = 0x12000, scoped, tag = 'internal scratch']
  %s0 = inlined_call_operand.vmem [shape: f32[2,4,256], index: 0, kind: input, shape index: {}]
  %s1 = inlined_call_operand.vmem [shape: f32[256,32], index: 1, kind: input, shape index: {}]
  %s2 = inlined_call_operand.vmem [shape: f32[4,8], index: 2, kind: input, shape index: {}]
  %s3 = inlined_call_operand.vmem [shape: f32[1,8], index: 3, kind: input, shape index: {}]
  %s4 = inlined_call_operand.vmem [shape: f32[8,4], index: 4, kind: input, shape index: {}]
  %s5 = inlined_call_operand.vmem [shape: f32[1,4], index: 5, kind: input, shape index: {}]
  %s6 = inlined_call_operand.vmem [shape: f32[8,4], index: 6, kind: input, shape index: {}]
  %s7 = inlined_call_operand.vmem [shape: f32[1,4], index: 7, kind: input, shape index: {}]
  %s8 = inlined_call_operand.vmem [shape: f32[2,16,4], index: 8, kind: output, shape index: {0}]
  %s9 = inlined_call_operand.vmem [shape: f32[2,16,4], index: 9, kind: output, shape index: {1}]
  %10 = xla_tuple %s8, %s9
  %s11 = sld [smem:[#allocation0]]
  $region73: #{tpu_custom_call.1} parent=0
    _
  %s13 = ssub.s32 1, %s11
  %s14 = scalar_select 0, %s13, %s11
  loop: start=0, step=1, limit=4
  $region2: #{tpu_custom_call.1} parent=0 // loop_pre_header
    _
  $region3: #{tpu_custom_call.1} parent=0 // loop_header
    %s16 = sphi 0, %s20
    %p17 = scmp.ge.s32.totalorder %s16, 4
    %s26 = sphi 0, %s28
    %s29 = sphi 0, %s26
    %s30 = sphi 0, %s29
    %s46 = sphi 0, %s30
    %s50 = sphi 0, %s50
    %s52 = sphi 0, %s50
    %s53 = sphi 0, %s52
    %s67 = sphi 0, %s53
    %s71 = sphi 0, %s71
    %s73 = sphi 0, %s71
    %s74 = sphi 0, %s73
    %s88 = sphi 0, %s74
    %s92 = sphi 0, %s92
    %s94 = sphi 0, %s92
    %s95 = sphi 0, %s94
    %s109 = sphi 0, %s95
    %s113 = sphi 0, %s113
    %s115 = sphi 0, %s113
    %s116 = sphi 0, %s115
    %s130 = sphi 0, %s116
    %s134 = sphi 0, %s134
    %s136 = sphi 0, %s134
    %s137 = sphi 0, %s136
    %s151 = sphi 0, %s137
    %s155 = sphi 0, %s155
    %s157 = sphi 0, %s155
    %s158 = sphi 0, %s157
    %s172 = sphi 0, %s158
    %s176 = sphi 0, %s176
    %s178 = sphi 0, %s176
    %s179 = sphi 0, %s178
    %s193 = sphi 0, %s179
    %s199 = sphi 0, %s201
    %s202 = sphi 0, %s199
    %s203 = sphi 0, %s202
    %s219 = sphi 0, %s203
    %s225 = sphi 0, %s227
    %s228 = sphi 0, %s225
    %s229 = sphi 0, %s228
    %s245 = sphi 0, %s229
  $region4: #{tpu_custom_call.1} parent=0 // loop_header_branch
    %19 = sbr.rel (%p17) target = $region8
  $region5: #{tpu_custom_call.1} parent=0 // loop_body
    %s21 = ssub.s32 %s16, 1
    %s22 = ssub.s32 %s16, 2
    %s23 = sadd.s32 %s16, 1
    %s24 = ssub.s32 %s16, %s23
    %p25 = scmp.eq.s32.totalorder %s24, 0
    %s27 = sadd.s32 %s26, 1
    %s28 = scalar_select %p25, %s26, %s27
    %p31 = pneg %p25
    %p32 = scmp.eq.s32.totalorder %s16, 1
    %p33 = por %p31, %p32
    %p34 = scmp.ne.s32.totalorder %s26, %s29
    %p35 = scmp.eq.s32.totalorder %s16, 0
    %p36 = por %p34, %p35
    %p37 = scmp.ne.s32.totalorder %s26, %s29
    %p38 = scmp.eq.s32.totalorder %s21, 1
    %p39 = por %p37, %p38
    %p40 = scmp.ne.s32.totalorder %s29, %s30
    %p41 = scmp.eq.s32.totalorder %s21, 0
    %p42 = por %p40, %p41
    %p43 = scmp.ne.s32.totalorder %s29, %s30
    %p44 = scmp.eq.s32.totalorder %s22, 1
    %p45 = por %p43, %p44
    %p47 = scmp.ne.s32.totalorder %s30, %s46
    %p48 = scmp.eq.s32.totalorder %s22, 0
    %p49 = por %p47, %p48
    %s51 = sadd.s32 %s50, 1
    %p54 = scmp.eq.s32.totalorder %s16, 1
    %p55 = scmp.ne.s32.totalorder %s50, %s52
    %p56 = scmp.eq.s32.totalorder %s16, 0
    %p57 = por %p55, %p56
    %p58 = scmp.ne.s32.totalorder %s50, %s52
    %p59 = scmp.eq.s32.totalorder %s21, 1
    %p60 = por %p58, %p59
    %p61 = scmp.ne.s32.totalorder %s52, %s53
    %p62 = scmp.eq.s32.totalorder %s21, 0
    %p63 = por %p61, %p62
    %p64 = scmp.ne.s32.totalorder %s52, %s53
    %p65 = scmp.eq.s32.totalorder %s22, 1
    %p66 = por %p64, %p65
    %p68 = scmp.ne.s32.totalorder %s53, %s67
    %p69 = scmp.eq.s32.totalorder %s22, 0
    %p70 = por %p68, %p69
    %s72 = sadd.s32 %s71, 1
    %p75 = scmp.eq.s32.totalorder %s16, 1
    %p76 = scmp.ne.s32.totalorder %s71, %s73
    %p77 = scmp.eq.s32.totalorder %s16, 0
    %p78 = por %p76, %p77
    %p79 = scmp.ne.s32.totalorder %s71, %s73
    %p80 = scmp.eq.s32.totalorder %s21, 1
    %p81 = por %p79, %p80
    %p82 = scmp.ne.s32.totalorder %s73, %s74
    %p83 = scmp.eq.s32.totalorder %s21, 0
    %p84 = por %p82, %p83
    %p85 = scmp.ne.s32.totalorder %s73, %s74
    %p86 = scmp.eq.s32.totalorder %s22, 1
    %p87 = por %p85, %p86
    %p89 = scmp.ne.s32.totalorder %s74, %s88
    %p90 = scmp.eq.s32.totalorder %s22, 0
    %p91 = por %p89, %p90
    %s93 = sadd.s32 %s92, 1
    %p96 = scmp.eq.s32.totalorder %s16, 1
    %p97 = scmp.ne.s32.totalorder %s92, %s94
    %p98 = scmp.eq.s32.totalorder %s16, 0
    %p99 = por %p97, %p98
    %p100 = scmp.ne.s32.totalorder %s92, %s94
    %p101 = scmp.eq.s32.totalorder %s21, 1
    %p102 = por %p100, %p101
    %p103 = scmp.ne.s32.totalorder %s94, %s95
    %p104 = scmp.eq.s32.totalorder %s21, 0
    %p105 = por %p103, %p104
    %p106 = scmp.ne.s32.totalorder %s94, %s95
    %p107 = scmp.eq.s32.totalorder %s22, 1
    %p108 = por %p106, %p107
    %p110 = scmp.ne.s32.totalorder %s95, %s109
    %p111 = scmp.eq.s32.totalorder %s22, 0
    %p112 = por %p110, %p111
    %s114 = sadd.s32 %s113, 1
    %p117 = scmp.eq.s32.totalorder %s16, 1
    %p118 = scmp.ne.s32.totalorder %s113, %s115
    %p119 = scmp.eq.s32.totalorder %s16, 0
    %p120 = por %p118, %p119
    %p121 = scmp.ne.s32.totalorder %s113, %s115
    %p122 = scmp.eq.s32.totalorder %s21, 1
    %p123 = por %p121, %p122
    %p124 = scmp.ne.s32.totalorder %s115, %s116
    %p125 = scmp.eq.s32.totalorder %s21, 0
    %p126 = por %p124, %p125
    %p127 = scmp.ne.s32.totalorder %s115, %s116
    %p128 = scmp.eq.s32.totalorder %s22, 1
    %p129 = por %p127, %p128
    %p131 = scmp.ne.s32.totalorder %s116, %s130
    %p132 = scmp.eq.s32.totalorder %s22, 0
    %p133 = por %p131, %p132
    %s135 = sadd.s32 %s134, 1
    %p138 = scmp.eq.s32.totalorder %s16, 1
    %p139 = scmp.ne.s32.totalorder %s134, %s136
    %p140 = scmp.eq.s32.totalorder %s16, 0
    %p141 = por %p139, %p140
    %p142 = scmp.ne.s32.totalorder %s134, %s136
    %p143 = scmp.eq.s32.totalorder %s21, 1
    %p144 = por %p142, %p143
    %p145 = scmp.ne.s32.totalorder %s136, %s137
    %p146 = scmp.eq.s32.totalorder %s21, 0
    %p147 = por %p145, %p146
    %p148 = scmp.ne.s32.totalorder %s136, %s137
    %p149 = scmp.eq.s32.totalorder %s22, 1
    %p150 = por %p148, %p149
    %p152 = scmp.ne.s32.totalorder %s137, %s151
    %p153 = scmp.eq.s32.totalorder %s22, 0
    %p154 = por %p152, %p153
    %s156 = sadd.s32 %s155, 1
    %p159 = scmp.eq.s32.totalorder %s16, 1
    %p160 = scmp.ne.s32.totalorder %s155, %s157
    %p161 = scmp.eq.s32.totalorder %s16, 0
    %p162 = por %p160, %p161
    %p163 = scmp.ne.s32.totalorder %s155, %s157
    %p164 = scmp.eq.s32.totalorder %s21, 1
    %p165 = por %p163, %p164
    %p166 = scmp.ne.s32.totalorder %s157, %s158
    %p167 = scmp.eq.s32.totalorder %s21, 0
    %p168 = por %p166, %p167
    %p169 = scmp.ne.s32.totalorder %s157, %s158
    %p170 = scmp.eq.s32.totalorder %s22, 1
    %p171 = por %p169, %p170
    %p173 = scmp.ne.s32.totalorder %s158, %s172
    %p174 = scmp.eq.s32.totalorder %s22, 0
    %p175 = por %p173, %p174
    %s177 = sadd.s32 %s176, 1
    %p180 = scmp.eq.s32.totalorder %s16, 1
    %p181 = scmp.ne.s32.totalorder %s176, %s178
    %p182 = scmp.eq.s32.totalorder %s16, 0
    %p183 = por %p181, %p182
    %p184 = scmp.ne.s32.totalorder %s176, %s178
    %p185 = scmp.eq.s32.totalorder %s21, 1
    %p186 = por %p184, %p185
    %p187 = scmp.ne.s32.totalorder %s178, %s179
    %p188 = scmp.eq.s32.totalorder %s21, 0
    %p189 = por %p187, %p188
    %p190 = scmp.ne.s32.totalorder %s178, %s179
    %p191 = scmp.eq.s32.totalorder %s22, 1
    %p192 = por %p190, %p191
    %p194 = scmp.ne.s32.totalorder %s179, %s193
    %p195 = scmp.eq.s32.totalorder %s22, 0
    %p196 = por %p194, %p195
    %s197 = ssub.s32 %s16, %s23
    %p198 = scmp.eq.s32.totalorder %s197, 0
    %s200 = sadd.s32 %s199, 1
    %s201 = scalar_select %p198, %s199, %s200
    %p204 = pneg %p198
    %p205 = scmp.eq.s32.totalorder %s16, 1
    %p206 = por %p204, %p205
    %p207 = scmp.ne.s32.totalorder %s199, %s202
    %p208 = scmp.eq.s32.totalorder %s16, 0
    %p209 = por %p207, %p208
    %p210 = scmp.ne.s32.totalorder %s199, %s202
    %p211 = scmp.eq.s32.totalorder %s21, 1
    %p212 = por %p210, %p211
    %p213 = scmp.ne.s32.totalorder %s202, %s203
    %p214 = scmp.eq.s32.totalorder %s21, 0
    %p215 = por %p213, %p214
    %p216 = scmp.ne.s32.totalorder %s202, %s203
    %p217 = scmp.eq.s32.totalorder %s22, 1
    %p218 = por %p216, %p217
    %p220 = scmp.ne.s32.totalorder %s203, %s219
    %p221 = scmp.eq.s32.totalorder %s22, 0
    %p222 = por %p220, %p221
    %s223 = ssub.s32 %s16, %s23
    %p224 = scmp.eq.s32.totalorder %s223, 0
    %s226 = sadd.s32 %s225, 1
    %s227 = scalar_select %p224, %s225, %s226
    %p230 = pneg %p224
    %p231 = scmp.eq.s32.totalorder %s16, 1
    %p232 = por %p230, %p231
    %p233 = scmp.ne.s32.totalorder %s225, %s228
    %p234 = scmp.eq.s32.totalorder %s16, 0
    %p235 = por %p233, %p234
    %p236 = scmp.ne.s32.totalorder %s225, %s228
    %p237 = scmp.eq.s32.totalorder %s21, 1
    %p238 = por %p236, %p237
    %p239 = scmp.ne.s32.totalorder %s228, %s229
    %p240 = scmp.eq.s32.totalorder %s21, 0
    %p241 = por %p239, %p240
    %p242 = scmp.ne.s32.totalorder %s228, %s229
    %p243 = scmp.eq.s32.totalorder %s22, 1
    %p244 = por %p242, %p243
    %p246 = scmp.ne.s32.totalorder %s229, %s245
    %p247 = scmp.eq.s32.totalorder %s22, 0
    %p248 = por %p246, %p247
    %p249 = scmp.le.s32.totalorder 1, %s16
    %p250 = scmp.lt.s32.totalorder %s16, 3
    %p251 = pnand %p249, %p250
    %p252 = pneg %p251
    // Predicated region
    $region9: #{tpu_custom_call.1} parent=5 // pred_check
      _
    $region10: #{tpu_custom_call.1} parent=5 // pred_check_branch
      %254 = sbr.rel (%p251) target = $region12
    $region11: #{tpu_custom_call.1} parent=5 // pred_region
      %s255 = ssub.s32 %s16, 1
      // Predicated region
      $region13: #{tpu_custom_call.1} parent=11 // pred_check
        %p256 = pneg %p63
      $region14: #{tpu_custom_call.1} parent=11 // pred_check_branch
        %258 = sbr.rel (%p256) target = $region16
      $region15: #{tpu_custom_call.1} parent=11 // pred_region
        _
      $region16: #{tpu_custom_call.1} parent=11 // pred_fallthru
        _
      // Predicated region
      $region17: #{tpu_custom_call.1} parent=11 // pred_check
        %p259 = pneg %p84
      $region18: #{tpu_custom_call.1} parent=11 // pred_check_branch
        %261 = sbr.rel (%p259) target = $region20
      $region19: #{tpu_custom_call.1} parent=11 // pred_region
        _
      $region20: #{tpu_custom_call.1} parent=11 // pred_fallthru
        _
      // Predicated region
      $region21: #{tpu_custom_call.1} parent=11 // pred_check
        %p262 = pneg %p105
      $region22: #{tpu_custom_call.1} parent=11 // pred_check_branch
        %264 = sbr.rel (%p262) target = $region24
      $region23: #{tpu_custom_call.1} parent=11 // pred_region
        _
      $region24: #{tpu_custom_call.1} parent=11 // pred_fallthru
        _
      // Predicated region
      $region25: #{tpu_custom_call.1} parent=11 // pred_check
        %p265 = pneg %p126
      $region26: #{tpu_custom_call.1} parent=11 // pred_check_branch
        %267 = sbr.rel (%p265) target = $region28
      $region27: #{tpu_custom_call.1} parent=11 // pred_region
        _
      $region28: #{tpu_custom_call.1} parent=11 // pred_fallthru
        _
      // Predicated region
      $region29: #{tpu_custom_call.1} parent=11 // pred_check
        %p268 = pneg %p147
      $region30: #{tpu_custom_call.1} parent=11 // pred_check_branch
        %270 = sbr.rel (%p268) target = $region32
      $region31: #{tpu_custom_call.1} parent=11 // pred_region
        _
      $region32: #{tpu_custom_call.1} parent=11 // pred_fallthru
        _
      // Predicated region
      $region33: #{tpu_custom_call.1} parent=11 // pred_check
        %p271 = pneg %p168
      $region34: #{tpu_custom_call.1} parent=11 // pred_check_branch
        %273 = sbr.rel (%p271) target = $region36
      $region35: #{tpu_custom_call.1} parent=11 // pred_region
        _
      $region36: #{tpu_custom_call.1} parent=11 // pred_fallthru
        _
      // Predicated region
      $region37: #{tpu_custom_call.1} parent=11 // pred_check
        %p274 = pneg %p189
      $region38: #{tpu_custom_call.1} parent=11 // pred_check_branch
        %276 = sbr.rel (%p274) target = $region40
      $region39: #{tpu_custom_call.1} parent=11 // pred_region
        _
      $region40: #{tpu_custom_call.1} parent=11 // pred_fallthru
        _
    $region12: #{tpu_custom_call.1} parent=5 // pred_fallthru
      _
    %p277 = scmp.lt.s32.totalorder %s16, 2
    // Predicated region
    $region41: #{tpu_custom_call.1} parent=5 // pred_check
      %p278 = pneg %p277
    $region42: #{tpu_custom_call.1} parent=5 // pred_check_branch
      %280 = sbr.rel (%p278) target = $region44
    $region43: #{tpu_custom_call.1} parent=5 // pred_region
      // Predicated region
      $region45: #{tpu_custom_call.1} parent=43 // pred_check
        %p281 = pneg %p36
      $region46: #{tpu_custom_call.1} parent=43 // pred_check_branch
        %283 = sbr.rel (%p281) target = $region48
      $region47: #{tpu_custom_call.1} parent=43 // pred_region
        %p284 = scmp.lt.s32.totalorder %s16, 1
        %s285 = scalar_select %p284, %s16, 1
        %s286 = smul.addr %s285, 2
        %s287 = smul.addr %s286, 4
        %s288 = scalar_lea.vmem %s0, %s287
      $region48: #{tpu_custom_call.1} parent=43 // pred_fallthru
        _
    $region44: #{tpu_custom_call.1} parent=5 // pred_fallthru
      _
    %p289 = scmp.le.s32.totalorder 1, %s16
    %p290 = scmp.lt.s32.totalorder %s16, 3
    %p291 = pnand %p289, %p290
    %p292 = pneg %p291
    // Predicated region
    $region49: #{tpu_custom_call.1} parent=5 // pred_check
      _
    $region50: #{tpu_custom_call.1} parent=5 // pred_check_branch
      %294 = sbr.rel (%p291) target = $region52
    $region51: #{tpu_custom_call.1} parent=5 // pred_region
      %s295 = ssub.s32 %s16, 1
      %p296 = scmp.lt.s32.totalorder %s21, 1
      %s297 = scalar_select %p296, %s21, 1
      %s298 = smul.addr %s297, 2
      %s299 = smul.addr %s298, 4
      %s300 = scalar_lea.vmem %s0, %s299
      %p301 = pneg %p42
      %p302 = pneg %p39
      %p303 = pneg %p63
      %p304 = pneg %p60
      %p305 = pneg %p84
      %p306 = pneg %p81
      %p307 = pneg %p105
      %p308 = pneg %p102
      %p309 = pneg %p126
      %p310 = pneg %p123
      %p311 = pneg %p147
      %p312 = pneg %p144
      %p313 = pneg %p168
      %p314 = pneg %p165
      %p315 = pneg %p189
      %p316 = pneg %p186
      %p317 = pneg %p215
      %p318 = pneg %p212
      %p319 = scmp.lt.s32.totalorder %s21, 1
      %s320 = scalar_select %p319, %s21, 1
      %s321 = smul.addr %s320, 2
      %s322 = smul.addr %s321, 8
      %s323 = scalar_lea.vmem %s8, %s322
      %p324 = pneg %p241
      %p325 = pneg %p238
      %p326 = scmp.lt.s32.totalorder %s21, 1
      %s327 = scalar_select %p326, %s21, 1
      %s328 = smul.addr %s327, 2
      %s329 = smul.addr %s328, 8
      %s330 = scalar_lea.vmem %s9, %s329
      %p331 = scmp.lt.s32.totalorder %s21, 1
      %s332 = scalar_select %p331, %s21, 1
      %s333 = smul.addr %s332, 2
      %s334 = smul.addr %s333, 4
      %s335 = scalar_lea.vmem %s0, %s334
      %p336 = scmp.lt.s32.totalorder %s21, 1
      %s337 = scalar_select %p336, %s21, 1
      %s338 = smul.addr %s337, 2
      %s339 = smul.addr %s338, 8
      %s340 = scalar_lea.vmem %s8, %s339
      %p341 = scmp.lt.s32.totalorder %s21, 1
      %s342 = scalar_select %p341, %s21, 1
      %s343 = smul.addr %s342, 2
      %s344 = smul.addr %s343, 8
      %s345 = scalar_lea.vmem %s9, %s344
      %v346 = vld [vmem:[%s335] sm:$0xff]
      %v347 = vld [vmem:[%s1] sm:$0xff]
      %v348 = vld [vmem:[%s1 + $0x8] sm:$0xff]
      %v349 = vld [vmem:[%s1 + $0x10] sm:$0xff]
      %v350 = vld [vmem:[%s1 + $0x18] sm:$0xff]
      %v351 = vld [vmem:[%s1 + $0x20] sm:$0xff]
      %v352 = vld [vmem:[%s1 + $0x28] sm:$0xff]
      %v353 = vld [vmem:[%s1 + $0x30] sm:$0xff]
      %v354 = vld [vmem:[%s1 + $0x38] sm:$0xff]
      %v355 = vld [vmem:[%s1 + $0x40] sm:$0xff]
      %v356 = vld [vmem:[%s1 + $0x48] sm:$0xff]
      %v357 = vld [vmem:[%s1 + $0x50] sm:$0xff]
      %v358 = vld [vmem:[%s1 + $0x58] sm:$0xff]
      %v359 = vld [vmem:[%s1 + $0x60] sm:$0xff]
      %v360 = vld [vmem:[%s1 + $0x68] sm:$0xff]
      %v361 = vld [vmem:[%s1 + $0x70] sm:$0xff]
      %v362 = vld [vmem:[%s1 + $0x78] sm:$0xff]
      %v363 = vld [vmem:[%s1 + $0x80] sm:$0xff]
      %v364 = vld [vmem:[%s1 + $0x88] sm:$0xff]
      %v365 = vld [vmem:[%s1 + $0x90] sm:$0xff]
      %v366 = vld [vmem:[%s1 + $0x98] sm:$0xff]
      %v367 = vld [vmem:[%s1 + $0xa0] sm:$0xff]
      %v368 = vld [vmem:[%s1 + $0xa8] sm:$0xff]
      %v369 = vld [vmem:[%s1 + $0xb0] sm:$0xff]
      %v370 = vld [vmem:[%s1 + $0xb8] sm:$0xff]
      %v371 = vld [vmem:[%s1 + $0xc0] sm:$0xff]
      %v372 = vld [vmem:[%s1 + $0xc8] sm:$0xff]
      %v373 = vld [vmem:[%s1 + $0xd0] sm:$0xff]
      %v374 = vld [vmem:[%s1 + $0xd8] sm:$0xff]
      %v375 = vld [vmem:[%s1 + $0xe0] sm:$0xff]
      %v376 = vld [vmem:[%s1 + $0xe8] sm:$0xff]
      %v377 = vld [vmem:[%s1 + $0xf0] sm:$0xff]
      %v378 = vld [vmem:[%s1 + $0xf8] sm:$0xff]
      %v380 = vcombine.high %v346, %v346
      %382 = vmatprep.subr.mxu0 0.0
      %383 = vmatpush1.msra.mxu0 %v347
      %384 = vmatprep.subr.mxu0 0.0
      %385 = vmatpush1.msra.mxu0 %v348
      %386 = vmatprep.subr.mxu0 0.0
      %387 = vmatpush1.msra.mxu0 %v349
      %388 = vmatprep.subr.mxu0 0.0
      %389 = vmatpush1.msra.mxu0 %v350
      %390 = vmatprep.subr.mxu0 0.0
      %391 = vmatpush1.msra.mxu0 %v351
      %392 = vmatprep.subr.mxu0 0.0
      %393 = vmatpush1.msra.mxu0 %v352
      %394 = vmatprep.subr.mxu0 0.0
      %395 = vmatpush1.msra.mxu0 %v353
      %396 = vmatprep.subr.mxu0 0.0
      %397 = vmatpush1.msra.mxu0 %v354
      %398 = vmatprep.subr.mxu0 0.0
      %399 = vmatpush1.msra.mxu0 %v355
      %400 = vmatprep.subr.mxu0 0.0
      %401 = vmatpush1.msra.mxu0 %v356
      %402 = vmatprep.subr.mxu0 0.0
      %403 = vmatpush1.msra.mxu0 %v357
      %404 = vmatprep.subr.mxu0 0.0
      %405 = vmatpush1.msra.mxu0 %v358
      %406 = vmatprep.subr.mxu0 0.0
      %407 = vmatpush1.msra.mxu0 %v359
      %408 = vmatprep.subr.mxu0 0.0
      %409 = vmatpush1.msra.mxu0 %v360
      %410 = vmatprep.subr.mxu0 0.0
      %411 = vmatpush1.msra.mxu0 %v361
      %412 = vmatprep.subr.mxu0 0.0
      %413 = vmatpush1.msra.mxu0 %v362
      %414 = vmatprep.subr.mxu0 0.0
      %415 = vmatpush1.msra.mxu0 %v363
      %416 = vmatprep.subr.mxu0 0.0
      %417 = vmatpush1.msra.mxu0 %v364
      %418 = vmatprep.subr.mxu0 0.0
      %419 = vmatpush1.msra.mxu0 %v365
      %420 = vmatprep.subr.mxu0 0.0
      %421 = vmatpush1.msra.mxu0 %v366
      %422 = vmatprep.subr.mxu0 0.0
      %423 = vmatpush1.msra.mxu0 %v367
      %424 = vmatprep.subr.mxu0 0.0
      %425 = vmatpush1.msra.mxu0 %v368
      %426 = vmatprep.subr.mxu0 0.0
      %427 = vmatpush1.msra.mxu0 %v369
      %428 = vmatprep.subr.mxu0 0.0
      %429 = vmatpush1.msra.mxu0 %v370
      %430 = vmatprep.subr.mxu0 0.0
      %431 = vmatpush1.msra.mxu0 %v371
      %432 = vmatprep.subr.mxu0 0.0
      %433 = vmatpush1.msra.mxu0 %v372
      %434 = vmatprep.subr.mxu0 0.0
      %435 = vmatpush1.msra.mxu0 %v373
      %436 = vmatprep.subr.mxu0 0.0
      %437 = vmatpush1.msra.mxu0 %v374
      %438 = vmatprep.subr.mxu0 0.0
      %439 = vmatpush1.msra.mxu0 %v375
      %440 = vmatprep.subr.mxu0 0.0
      %441 = vmatpush1.msra.mxu0 %v376
      %442 = vmatprep.subr.mxu0 0.0
      %443 = vmatpush1.msra.mxu0 %v377
      %444 = vmatprep.subr.mxu0 0.0
      %445 = vmatpush1.msra.mxu0 %v378
      %446 = vmatprep.mubr.f32.mxu0 %v380
      %447 = vmatmul.mubr.f32.gmra.mrb[0].mxu0 %v346
      %v448 = vpop.f32.mrb[0].mxu0
      %v449 = vadd.f32 0.0, %v448
      %v450 = vpop.f32.mrb[0].mxu0
      %451 = vdwg.mxu0
      %452 = vxpose.xlu0.b32.start [1/16] %v449, 128
      %453 = vxpose.xlu0.b32.cont [2/16] 0.0, 128
      %454 = vxpose.xlu0.b32.cont [3/16] 0.0, 128
      %455 = vxpose.xlu0.b32.cont [4/16] 0.0, 128
      %456 = vxpose.xlu0.b32.cont [5/16] 0.0, 128
      %457 = vxpose.xlu0.b32.cont [6/16] 0.0, 128
      %458 = vxpose.xlu0.b32.cont [7/16] 0.0, 128
      %459 = vxpose.xlu0.b32.cont [8/16] 0.0, 128
      %460 = vxpose.xlu0.b32.cont [9/16] 0.0, 128
      %461 = vxpose.xlu0.b32.cont [10/16] 0.0, 128
      %462 = vxpose.xlu0.b32.cont [11/16] 0.0, 128
      %463 = vxpose.xlu0.b32.cont [12/16] 0.0, 128
      %464 = vxpose.xlu0.b32.cont [13/16] 0.0, 128
      %465 = vxpose.xlu0.b32.cont [14/16] 0.0, 128
      %466 = vxpose.xlu0.b32.cont [15/16] 0.0, 128
      %467 = vxpose.xlu0.b32.end [16/16] 0.0, 128
      %v468 = vpop.trf.xlu0
      %v469 = vpop.trf.xlu0
      %v470 = vpop.trf.xlu0
      %v471 = vpop.trf.xlu0
      %v472 = vpop.trf.xlu0
      %v473 = vpop.trf.xlu0
      %v474 = vpop.trf.xlu0
      %v475 = vpop.trf.xlu0
      %v476 = vpop.trf.xlu0
      %v477 = vpop.trf.xlu0
      %v478 = vpop.trf.xlu0
      %v479 = vpop.trf.xlu0
      %v480 = vpop.trf.xlu0
      %v481 = vpop.trf.xlu0
      %v482 = vpop.trf.xlu0
      %v483 = vpop.trf.xlu0
      %v484 = vld [vmem:[%s2] sm:$0xf]
      %v485 = vld [vmem:[%s3] sm:$0x1]
      %v487 = vlaneseq
      %v488 = vshrl.u32 %v487, 7
      %v489 = vsub.s32 0, %v488
      %v490 = vrot.slane %v485, %v489
      %vm492 = vcmask 31744
      %v494 = vsel %vm492, %v468, 0
      %v497 = vsel %vm492, %v469, 0
      %v500 = vsel %vm492, %v470, 0
      %v503 = vsel %vm492, %v471, 0
      %vm505 = vcmask 1043456
      %v507 = vsel %vm505, %v484, 0
      %509 = vmatprep.subr.mxu0 0.0
      %510 = vmatpush1.msra.mxu0 %v507
      %511 = vmatprep.subr.mxu0 0.0
      %512 = vmatpush1.msra.mxu0 0.0
      %513 = vmatprep.subr.mxu0 0.0
      %514 = vmatpush1.msra.mxu0 0.0
      %515 = vmatprep.subr.mxu0 0.0
      %516 = vmatpush1.msra.mxu0 0.0
      %517 = vmatprep.subr.mxu0 0.0
      %518 = vmatpush1.msra.mxu0 0.0
      %519 = vmatprep.subr.mxu0 0.0
      %520 = vmatpush1.msra.mxu0 0.0
      %521 = vmatprep.subr.mxu0 0.0
      %522 = vmatpush1.msra.mxu0 0.0
      %523 = vmatprep.subr.mxu0 0.0
      %524 = vmatpush1.msra.mxu0 0.0
      %525 = vmatprep.subr.mxu0 0.0
      %526 = vmatpush1.msra.mxu0 0.0
      %527 = vmatprep.subr.mxu0 0.0
      %528 = vmatpush1.msra.mxu0 0.0
      %529 = vmatprep.subr.mxu0 0.0
      %530 = vmatpush1.msra.mxu0 0.0
      %531 = vmatprep.subr.mxu0 0.0
      %532 = vmatpush1.msra.mxu0 0.0
      %533 = vmatprep.subr.mxu0 0.0
      %534 = vmatpush1.msra.mxu0 0.0
      %535 = vmatprep.subr.mxu0 0.0
      %536 = vmatpush1.msra.mxu0 0.0
      %537 = vmatprep.subr.mxu0 0.0
      %538 = vmatpush1.msra.mxu0 0.0
      %539 = vmatprep.subr.mxu0 0.0
      %540 = vmatpush1.msra.mxu0 0.0
      %541 = vmatprep.subr.mxu0 0.0
      %542 = vmatpush1.msra.mxu0 0.0
      %543 = vmatprep.subr.mxu0 0.0
      %544 = vmatpush1.msra.mxu0 0.0
      %545 = vmatprep.subr.mxu0 0.0
      %546 = vmatpush1.msra.mxu0 0.0
      %547 = vmatprep.subr.mxu0 0.0
      %548 = vmatpush1.msra.mxu0 0.0
      %549 = vmatprep.subr.mxu0 0.0
      %550 = vmatpush1.msra.mxu0 0.0
      %551 = vmatprep.subr.mxu0 0.0
      %552 = vmatpush1.msra.mxu0 0.0
      %553 = vmatprep.subr.mxu0 0.0
      %554 = vmatpush1.msra.mxu0 0.0
      %555 = vmatprep.subr.mxu0 0.0
      %556 = vmatpush1.msra.mxu0 0.0
      %557 = vmatprep.subr.mxu0 0.0
      %558 = vmatpush1.msra.mxu0 0.0
      %559 = vmatprep.subr.mxu0 0.0
      %560 = vmatpush1.msra.mxu0 0.0
      %561 = vmatprep.subr.mxu0 0.0
      %562 = vmatpush1.msra.mxu0 0.0
      %563 = vmatprep.subr.mxu0 0.0
      %564 = vmatpush1.msra.mxu0 0.0
      %565 = vmatprep.subr.mxu0 0.0
      %566 = vmatpush1.msra.mxu0 0.0
      %567 = vmatprep.subr.mxu0 0.0
      %568 = vmatpush1.msra.mxu0 0.0
      %569 = vmatprep.subr.mxu0 0.0
      %570 = vmatpush1.msra.mxu0 0.0
      %571 = vmatprep.subr.mxu0 0.0
      %572 = vmatpush1.msra.mxu0 0.0
      %573 = vmatprep.mubr.f32.mxu0 0.0
      %574 = vmatmul.mubr.f32.gmra.mrb[0].mxu0 %v494
      %v575 = vpop.f32.mrb[0].mxu0
      %v576 = vadd.f32 %v490, %v575
      %v577 = vpop.f32.mrb[0].mxu0
      %578 = vmatprep.mubr.f32.mxu0 0.0
      %579 = vmatmul.mubr.f32.gmra.mrb[0].mxu0 %v497
      %v580 = vpop.f32.mrb[0].mxu0
      %v581 = vadd.f32 %v490, %v580
      %v582 = vpop.f32.mrb[0].mxu0
      %583 = vmatprep.mubr.f32.mxu0 0.0
      %584 = vmatmul.mubr.f32.gmra.mrb[0].mxu0 %v500
      %v585 = vpop.f32.mrb[0].mxu0
      %v586 = vadd.f32 %v490, %v585
      %v587 = vpop.f32.mrb[0].mxu0
      %588 = vmatprep.mubr.f32.mxu0 0.0
      %589 = vmatmul.mubr.f32.gmra.mrb[0].mxu0 %v503
      %v590 = vpop.f32.mrb[0].mxu0
      %v591 = vadd.f32 %v490, %v590
      %v592 = vpop.f32.mrb[0].mxu0
      %593 = vdwg.mxu0
      %v594 = vadd.f32 %v576, 3.0
      %v595 = vadd.f32 %v581, 3.0
      %v596 = vadd.f32 %v586, 3.0
      %v597 = vadd.f32 %v591, 3.0
      %v598 = vmax.f32 %v594, 0.0
      %v599 = vmax.f32 %v595, 0.0
      %v600 = vmax.f32 %v596, 0.0
      %v601 = vmax.f32 %v597, 0.0
      %v602 = vmin.f32 %v598, 6.0
      %v603 = vmin.f32 %v599, 6.0
      %v604 = vmin.f32 %v600, 6.0
      %v605 = vmin.f32 %v601, 6.0
      %v606 = vmul.f32 %v602, 0.16666667
      %v607 = vmul.f32 %v603, 0.16666667
      %v608 = vmul.f32 %v604, 0.16666667
      %v609 = vmul.f32 %v605, 0.16666667
      %v610 = vmul.f32 %v576, %v606
      %v611 = vmul.f32 %v581, %v607
      %v612 = vmul.f32 %v586, %v608
      %v613 = vmul.f32 %v591, %v609
      %v614 = vld [vmem:[%s4] sm:$0xff]
      %v615 = vld [vmem:[%s5] sm:$0x1]
      %v617 = vlaneseq
      %v618 = vshrl.u32 %v617, 7
      %v619 = vsub.s32 0, %v618
      %v620 = vrot.slane %v615, %v619
      %vm622 = vcmask 64512
      %v624 = vsel %vm622, %v610, 0
      %v627 = vsel %vm622, %v611, 0
      %629 = vmatprep.subr.mxu0 0.0
      %630 = vmatpush1.msra.mxu0 %v614
      %631 = vmatprep.subr.mxu0 0.0
      %632 = vmatpush1.msra.mxu0 0.0
      %633 = vmatprep.subr.mxu0 0.0
      %634 = vmatpush1.msra.mxu0 0.0
      %635 = vmatprep.subr.mxu0 0.0
      %636 = vmatpush1.msra.mxu0 0.0
      %637 = vmatprep.subr.mxu0 0.0
      %638 = vmatpush1.msra.mxu0 0.0
      %639 = vmatprep.subr.mxu0 0.0
      %640 = vmatpush1.msra.mxu0 0.0
      %641 = vmatprep.subr.mxu0 0.0
      %642 = vmatpush1.msra.mxu0 0.0
      %643 = vmatprep.subr.mxu0 0.0
      %644 = vmatpush1.msra.mxu0 0.0
      %645 = vmatprep.subr.mxu0 0.0
      %646 = vmatpush1.msra.mxu0 0.0
      %647 = vmatprep.subr.mxu0 0.0
      %648 = vmatpush1.msra.mxu0 0.0
      %649 = vmatprep.subr.mxu0 0.0
      %650 = vmatpush1.msra.mxu0 0.0
      %651 = vmatprep.subr.mxu0 0.0
      %652 = vmatpush1.msra.mxu0 0.0
      %653 = vmatprep.subr.mxu0 0.0
      %654 = vmatpush1.msra.mxu0 0.0
      %655 = vmatprep.subr.mxu0 0.0
      %656 = vmatpush1.msra.mxu0 0.0
      %657 = vmatprep.subr.mxu0 0.0
      %658 = vmatpush1.msra.mxu0 0.0
      %659 = vmatprep.subr.mxu0 0.0
      %660 = vmatpush1.msra.mxu0 0.0
      %661 = vmatprep.subr.mxu0 0.0
      %662 = vmatpush1.msra.mxu0 0.0
      %663 = vmatprep.subr.mxu0 0.0
      %664 = vmatpush1.msra.mxu0 0.0
      %665 = vmatprep.subr.mxu0 0.0
      %666 = vmatpush1.msra.mxu0 0.0
      %667 = vmatprep.subr.mxu0 0.0
      %668 = vmatpush1.msra.mxu0 0.0
      %669 = vmatprep.subr.mxu0 0.0
      %670 = vmatpush1.msra.mxu0 0.0
      %671 = vmatprep.subr.mxu0 0.0
      %672 = vmatpush1.msra.mxu0 0.0
      %673 = vmatprep.subr.mxu0 0.0
      %674 = vmatpush1.msra.mxu0 0.0
      %675 = vmatprep.subr.mxu0 0.0
      %676 = vmatpush1.msra.mxu0 0.0
      %677 = vmatprep.subr.mxu0 0.0
      %678 = vmatpush1.msra.mxu0 0.0
      %679 = vmatprep.subr.mxu0 0.0
      %680 = vmatpush1.msra.mxu0 0.0
      %681 = vmatprep.subr.mxu0 0.0
      %682 = vmatpush1.msra.mxu0 0.0
      %683 = vmatprep.subr.mxu0 0.0
      %684 = vmatpush1.msra.mxu0 0.0
      %685 = vmatprep.subr.mxu0 0.0
      %686 = vmatpush1.msra.mxu0 0.0
      %687 = vmatprep.subr.mxu0 0.0
      %688 = vmatpush1.msra.mxu0 0.0
      %689 = vmatprep.subr.mxu0 0.0
      %690 = vmatpush1.msra.mxu0 0.0
      %691 = vmatprep.subr.mxu0 0.0
      %692 = vmatpush1.msra.mxu0 0.0
      %693 = vmatprep.mubr.f32.mxu0 0.0
      %694 = vmatmul.mubr.f32.gmra.mrb[0].mxu0 %v624
      %v695 = vpop.f32.mrb[0].mxu0
      %v696 = vadd.f32 %v620, %v695
      %v697 = vpop.f32.mrb[0].mxu0
      %698 = vmatprep.mubr.f32.mxu0 0.0
      %699 = vmatmul.mubr.f32.gmra.mrb[0].mxu0 %v627
      %v700 = vpop.f32.mrb[0].mxu0
      %v701 = vadd.f32 %v620, %v700
      %v702 = vpop.f32.mrb[0].mxu0
      %703 = vdwg.mxu0
      %v704 = vxor.u32 %v696, 2147483648
      %v705 = vxor.u32 %v701, 2147483648
      %v706 = vmul.f32 %v704, 1.442695
      %v707 = vpow.pop %v706
      %v708 = vmul.f32 %v705, 1.442695
      %v709 = vpow.pop %v708
      %v710 = vadd.f32 %v707, 1.0
      %v711 = vadd.f32 %v709, 1.0
      %v712 = vrcp.pop %v710
      %v713 = vmul.f32 1.0, %v712
      %v714 = vrcp.pop %v711
      %v715 = vmul.f32 1.0, %v714
      %v716 = vld [vmem:[%s6] sm:$0xff]
      %v717 = vld [vmem:[%s7] sm:$0x1]
      %v719 = vlaneseq
      %v720 = vshrl.u32 %v719, 7
      %v721 = vsub.s32 0, %v720
      %v722 = vrot.slane %v717, %v721
      %v725 = vsel %vm622, %v612, 0
      %v728 = vsel %vm622, %v613, 0
      %730 = vmatprep.subr.mxu0 0.0
      %731 = vmatpush1.msra.mxu0 %v716
      %732 = vmatprep.subr.mxu0 0.0
      %733 = vmatpush1.msra.mxu0 0.0
      %734 = vmatprep.subr.mxu0 0.0
      %735 = vmatpush1.msra.mxu0 0.0
      %736 = vmatprep.subr.mxu0 0.0
      %737 = vmatpush1.msra.mxu0 0.0
      %738 = vmatprep.subr.mxu0 0.0
      %739 = vmatpush1.msra.mxu0 0.0
      %740 = vmatprep.subr.mxu0 0.0
      %741 = vmatpush1.msra.mxu0 0.0
      %742 = vmatprep.subr.mxu0 0.0
      %743 = vmatpush1.msra.mxu0 0.0
      %744 = vmatprep.subr.mxu0 0.0
      %745 = vmatpush1.msra.mxu0 0.0
      %746 = vmatprep.subr.mxu0 0.0
      %747 = vmatpush1.msra.mxu0 0.0
      %748 = vmatprep.subr.mxu0 0.0
      %749 = vmatpush1.msra.mxu0 0.0
      %750 = vmatprep.subr.mxu0 0.0
      %751 = vmatpush1.msra.mxu0 0.0
      %752 = vmatprep.subr.mxu0 0.0
      %753 = vmatpush1.msra.mxu0 0.0
      %754 = vmatprep.subr.mxu0 0.0
      %755 = vmatpush1.msra.mxu0 0.0
      %756 = vmatprep.subr.mxu0 0.0
      %757 = vmatpush1.msra.mxu0 0.0
      %758 = vmatprep.subr.mxu0 0.0
      %759 = vmatpush1.msra.mxu0 0.0
      %760 = vmatprep.subr.mxu0 0.0
      %761 = vmatpush1.msra.mxu0 0.0
      %762 = vmatprep.subr.mxu0 0.0
      %763 = vmatpush1.msra.mxu0 0.0
      %764 = vmatprep.subr.mxu0 0.0
      %765 = vmatpush1.msra.mxu0 0.0
      %766 = vmatprep.subr.mxu0 0.0
      %767 = vmatpush1.msra.mxu0 0.0
      %768 = vmatprep.subr.mxu0 0.0
      %769 = vmatpush1.msra.mxu0 0.0
      %770 = vmatprep.subr.mxu0 0.0
      %771 = vmatpush1.msra.mxu0 0.0
      %772 = vmatprep.subr.mxu0 0.0
      %773 = vmatpush1.msra.mxu0 0.0
      %774 = vmatprep.subr.mxu0 0.0
      %775 = vmatpush1.msra.mxu0 0.0
      %776 = vmatprep.subr.mxu0 0.0
      %777 = vmatpush1.msra.mxu0 0.0
      %778 = vmatprep.subr.mxu0 0.0
      %779 = vmatpush1.msra.mxu0 0.0
      %780 = vmatprep.subr.mxu0 0.0
      %781 = vmatpush1.msra.mxu0 0.0
      %782 = vmatprep.subr.mxu0 0.0
      %783 = vmatpush1.msra.mxu0 0.0
      %784 = vmatprep.subr.mxu0 0.0
      %785 = vmatpush1.msra.mxu0 0.0
      %786 = vmatprep.subr.mxu0 0.0
      %787 = vmatpush1.msra.mxu0 0.0
      %788 = vmatprep.subr.mxu0 0.0
      %789 = vmatpush1.msra.mxu0 0.0
      %790 = vmatprep.subr.mxu0 0.0
      %791 = vmatpush1.msra.mxu0 0.0
      %792 = vmatprep.subr.mxu0 0.0
      %793 = vmatpush1.msra.mxu0 0.0
      %794 = vmatprep.mubr.f32.mxu0 0.0
      %795 = vmatmul.mubr.f32.gmra.mrb[0].mxu0 %v725
      %v796 = vpop.f32.mrb[0].mxu0
      %v797 = vadd.f32 %v722, %v796
      %v798 = vpop.f32.mrb[0].mxu0
      %799 = vmatprep.mubr.f32.mxu0 0.0
      %800 = vmatmul.mubr.f32.gmra.mrb[0].mxu0 %v728
      %v801 = vpop.f32.mrb[0].mxu0
      %v802 = vadd.f32 %v722, %v801
      %v803 = vpop.f32.mrb[0].mxu0
      %804 = vdwg.mxu0
      %v805 = vxor.u32 %v797, 2147483648
      %v806 = vxor.u32 %v802, 2147483648
      %v807 = vmul.f32 %v805, 1.442695
      %v808 = vpow.pop %v807
      %v809 = vmul.f32 %v806, 1.442695
      %v810 = vpow.pop %v809
      %v811 = vadd.f32 %v808, 1.0
      %v812 = vadd.f32 %v810, 1.0
      %v813 = vrcp.pop %v811
      %v814 = vmul.f32 1.0, %v813
      %v815 = vrcp.pop %v812
      %v816 = vmul.f32 1.0, %v815
      %817 = vst.msk [vmem:[%s340] sm:$0xff] %vm492, %v713
      %818 = vst.msk [vmem:[%s340 + $0x8] sm:$0xff] %vm492, %v715
      %819 = vst.msk [vmem:[%s345] sm:$0xff] %vm492, %v814
      %820 = vst.msk [vmem:[%s345 + $0x8] sm:$0xff] %vm492, %v816
      %p821 = scmp.lt.s32.totalorder %s21, 1
      %s822 = scalar_select %p821, %s21, 1
      %s823 = smul.addr %s822, 2
      %s824 = smul.addr %s823, 8
      %s825 = scalar_lea.vmem %s8, %s824
      %p826 = scmp.lt.s32.totalorder %s21, 1
      %s827 = scalar_select %p826, %s21, 1
      %s828 = smul.addr %s827, 2
      %s829 = smul.addr %s828, 8
      %s830 = scalar_lea.vmem %s9, %s829
      // Predicated region
      $region53: #{tpu_custom_call.1} parent=51 // pred_check
        %p831 = pneg %p212
      $region54: #{tpu_custom_call.1} parent=51 // pred_check_branch
        %833 = sbr.rel (%p831) target = $region56
      $region55: #{tpu_custom_call.1} parent=51 // pred_region
        _
      $region56: #{tpu_custom_call.1} parent=51 // pred_fallthru
        _
      // Predicated region
      $region57: #{tpu_custom_call.1} parent=51 // pred_check
        %p834 = pneg %p238
      $region58: #{tpu_custom_call.1} parent=51 // pred_check_branch
        %836 = sbr.rel (%p834) target = $region60
      $region59: #{tpu_custom_call.1} parent=51 // pred_region
        _
      $region60: #{tpu_custom_call.1} parent=51 // pred_fallthru
        _
    $region52: #{tpu_custom_call.1} parent=5 // pred_fallthru
      _
    %p837 = scmp.le.s32.totalorder 2, %s16
    // Predicated region
    $region61: #{tpu_custom_call.1} parent=5 // pred_check
      %p838 = pneg %p837
    $region62: #{tpu_custom_call.1} parent=5 // pred_check_branch
      %840 = sbr.rel (%p838) target = $region64
    $region63: #{tpu_custom_call.1} parent=5 // pred_region
      %s841 = ssub.s32 %s16, 2
      // Predicated region
      $region65: #{tpu_custom_call.1} parent=63 // pred_check
        %p842 = pneg %p218
      $region66: #{tpu_custom_call.1} parent=63 // pred_check_branch
        %844 = sbr.rel (%p842) target = $region68
      $region67: #{tpu_custom_call.1} parent=63 // pred_region
        %p845 = scmp.lt.s32.totalorder %s22, 1
        %s846 = scalar_select %p845, %s22, 1
        %s847 = smul.addr %s846, 2
        %s848 = smul.addr %s847, 8
        %s849 = scalar_lea.vmem %s8, %s848
      $region68: #{tpu_custom_call.1} parent=63 // pred_fallthru
        _
      // Predicated region
      $region69: #{tpu_custom_call.1} parent=63 // pred_check
        %p850 = pneg %p244
      $region70: #{tpu_custom_call.1} parent=63 // pred_check_branch
        %852 = sbr.rel (%p850) target = $region72
      $region71: #{tpu_custom_call.1} parent=63 // pred_region
        %p853 = scmp.lt.s32.totalorder %s22, 1
        %s854 = scalar_select %p853, %s22, 1
        %s855 = smul.addr %s854, 2
        %s856 = smul.addr %s855, 8
        %s857 = scalar_lea.vmem %s9, %s856
      $region72: #{tpu_custom_call.1} parent=63 // pred_fallthru
        _
    $region64: #{tpu_custom_call.1} parent=5 // pred_fallthru
      _
  $region6: #{tpu_custom_call.1} parent=0 // loop_footer
    %s20 = sadd.s32 1, %s16
  $region7: #{tpu_custom_call.1} parent=0 // loop_footer_branch
    %15 = sbr.rel target = $region3
  $region8: #{tpu_custom_call.1} parent=0 // loop_exit
    _

</llo_original>
